<compile_context>
chip_gen: v5e
topology: v5e:2x2
jax: 0.10.0
libtpu: 0.0.40
codegen_flags: <defaults>
</compile_context>

<pallas_src>
import jax
import jax.numpy as jnp
from jax.experimental import pallas as pl
from jax.experimental.pallas import tpu as pltpu

LANE = 128


def _round_up(n, m):
    return ((n + m - 1) // m) * m


def _pad_to(a, shape):
    if tuple(a.shape) == tuple(shape):
        return a
    return jnp.pad(a, tuple((0, t - s) for s, t in zip(a.shape, shape)))


def _vmem_capacity_bytes():
    try:
        return int(pltpu.get_tpu_info().vmem_capacity_bytes)
    except Exception:
        return 64 * 1024 * 1024  # conservative fallback (v7x per-core VMEM)


def autoencoder_kernel(x_ref, w1_ref, b1_ref, w2_ref, b2_ref, o_ref):
    # Cast x to the matmul dtype in-kernel (avoids a host-side HBM cast pass).
    x = x_ref[...].astype(w1_ref.dtype)
    # Encoder: h = relu(x @ W1 + b1)   (MXU accumulates in f32; bias/ReLU in f32 on VPU)
    h = jnp.dot(x, w1_ref[...], preferred_element_type=jnp.float32)
    h = jnp.maximum(h + b1_ref[...], 0.0)
    # Decoder: y = sigmoid(h @ W2 + b2)  (cast h to matmul dtype, accumulate f32, EUP sigmoid)
    y = jnp.dot(h.astype(w2_ref.dtype), w2_ref[...],
                preferred_element_type=jnp.float32)
    o_ref[...] = jax.nn.sigmoid(y + b2_ref[...]).astype(o_ref.dtype)


def autoencoder_forward(x, w1, b1, w2, b2, *, batch_tile=None,
                        matmul_dtype=jnp.bfloat16, out_dtype=None):
    """x: (B, input_dim); w1: (input_dim, enc); b1: (1, enc) or (enc,);
       w2: (enc, input_dim); b2: (1, input_dim) or (input_dim,)."""
    B, input_dim = x.shape
    enc_dim = w1.shape[1]
    assert w1.shape == (input_dim, enc_dim)
    assert w2.shape == (enc_dim, input_dim)

    mdt = jnp.dtype(matmul_dtype)
    odt = jnp.dtype(out_dtype) if out_dtype is not None else mdt
    x_item = jnp.dtype(x.dtype).itemsize
    w_item = mdt.itemsize
    o_item = odt.itemsize
    # Sublane multiple that satisfies block-shape tiling for both x (load) and out (store).
    sublane = 16 if min(x_item, o_item) < 4 else 8

    # --- lane-dense padding of feature dims (multiples of 128; zeros keep matmul exact) ---
    in_p = _round_up(input_dim, LANE)
    enc_p = _round_up(enc_dim, LANE)

    # --- generation-aware VMEM budget ---
    vmem_cap = _vmem_capacity_bytes()
    budget = (vmem_cap * 3) // 4  # ~48 MiB on v7x, ~96 MiB on v5e/v6e: headroom for scratch

    # Weights/biases counted double-buffered (default pipelining; constant index_map means
    # they are not re-DMA'd per step -- this is only a footprint, not bandwidth, cost).
    w_bytes = 2 * ((in_p * enc_p + enc_p * in_p) * w_item + (enc_p + in_p) * 4)
    per_row = 2 * in_p * x_item + 2 * in_p * o_item + (enc_p + in_p) * 4

    if batch_tile is None:
        # Byte-targeted tile: ~2 MiB of x per grid step keeps DMA well above the ~0.35 us
        # per-step overhead, bounded by the VMEM budget and the batch itself.
        target = max((2 * 1024 * 1024) // max(in_p * x_item, 1), sublane)
        fit = max((budget - w_bytes) // per_row, sublane)
        bt = min(target, fit, _round_up(B, sublane))
        # Guarantee >= 2 grid steps when the batch permits (v7x megacore has 2 TCs).
        if B >= 2 * sublane:
            bt = min(bt, _round_up(pl.cdiv(B, 2), sublane))
        batch_tile = max((bt // sublane) * sublane, sublane)
    assert batch_tile % sublane == 0, "batch_tile must be a sublane multiple"

    # No batch padding in general (Pallas masks the partial last block; rows independent).
    # Only pad when the whole batch is smaller than one block (tiny batches, cheap).
    B_p = B if B >= batch_tile else batch_tile
    grid = (pl.cdiv(B_p, batch_tile),)

    # Explicit VMEM limit from the estimate, capped at the per-generation budget.
    est = w_bytes + per_row * batch_tile + (2 << 20)
    vmem_limit = int(min(max(est, 32 * 1024 * 1024), budget))

    # --- prepare operands (all pads/casts skipped when already aligned / correct dtype) ---
    x_p = _pad_to(x, (B_p, in_p))                                   # keep x dtype; cast in-kernel
    w1_p = _pad_to(w1.astype(mdt), (in_p, enc_p))
    w2_p = _pad_to(w2.astype(mdt), (enc_p, in_p))
    b1_p = _pad_to(jnp.reshape(b1, (1, -1)).astype(jnp.float32), (1, enc_p))
    b2_p = _pad_to(jnp.reshape(b2, (1, -1)).astype(jnp.float32), (1, in_p))

    cost = pl.CostEstimate(
        flops=4 * B_p * in_p * enc_p,
        transcendentals=B_p * in_p,
        bytes_accessed=(B_p * in_p * (x_item + o_item)
                        + (in_p * enc_p + enc_p * in_p) * w_item
                        + (enc_p + in_p) * 4),
    )

    in_specs = [
        pl.BlockSpec((batch_tile, in_p), lambda i: (i, 0)),
        pl.BlockSpec((in_p, enc_p), lambda i: (0, 0)),   # grid-invariant: DMA'd once
        pl.BlockSpec((1, enc_p), lambda i: (0, 0)),
        pl.BlockSpec((enc_p, in_p), lambda i: (0, 0)),
        pl.BlockSpec((1, in_p), lambda i: (0, 0)),
    ]
    out_specs = pl.BlockSpec((batch_tile, in_p), lambda i: (i, 0))

    out_p = pl.pallas_call(
        autoencoder_kernel,
        out_shape=jax.ShapeDtypeStruct((B_p, in_p), odt),
        grid_spec=pltpu.PrefetchScalarGridSpec(
            num_scalar_prefetch=0,
            grid=grid,
            in_specs=in_specs,
            out_specs=out_specs,
        ),
        compiler_params=pltpu.CompilerParams(
            dimension_semantics=("parallel",),
            vmem_limit_bytes=vmem_limit,
        ),
        cost_estimate=cost,
    )(x_p, w1_p, b1_p, w2_p, b2_p)

    if B_p != B or in_p != input_dim:
        out_p = out_p[:B, :input_dim]
    return out_p


def init_params(key, input_dim, encoding_dim):
    """Deterministic init matching PyTorch nn.Linear default (uniform +/- 1/sqrt(fan_in)).
       Weights stored pre-transposed: (in_features, out_features)."""
    k1, k2, k3, k4 = jax.random.split(key, 4)
    bound1 = 1.0 / jnp.sqrt(input_dim)
    bound2 = 1.0 / jnp.sqrt(encoding_dim)
    w1 = jax.random.uniform(k1, (input_dim, encoding_dim), jnp.float32, -bound1, bound1)
    b1 = jax.random.uniform(k2, (1, encoding_dim), jnp.float32, -bound1, bound1)
    w2 = jax.random.uniform(k3, (encoding_dim, input_dim), jnp.float32, -bound2, bound2)
    b2 = jax.random.uniform(k4, (1, input_dim), jnp.float32, -bound2, bound2)
    return w1, b1, w2, b2


def reference_forward(x, w1, b1, w2, b2):
    h = jnp.maximum(x @ w1 + b1, 0.0)
    return jax.nn.sigmoid(h @ w2 + b2)


if __name__ == "__main__":
    key = jax.random.PRNGKey(0)
    batch, input_dim, encoding_dim = 8, 64, 32

    kx, kp = jax.random.split(key)
    x = jax.random.normal(kx, (batch, input_dim), jnp.float32)
    w1, b1, w2, b2 = init_params(kp, input_dim, encoding_dim)

    ref = reference_forward(x, w1, b1, w2, b2)

    # Opt-in exact mode: f32 operands + f32 output.
    out_f32 = jax.block_until_ready(
        autoencoder_forward(x, w1, b1, w2, b2,
                            matmul_dtype=jnp.float32, out_dtype=jnp.float32))
    assert out_f32.shape == (batch, input_dim)
    assert out_f32.dtype == jnp.float32
    assert jnp.allclose(out_f32, ref, atol=1e-5, rtol=1e-5), "f32 mismatch vs reference"

    # Default path: bf16 operands, f32 MXU accumulation, bf16 output.
    out_bf16 = jax.block_until_ready(autoencoder_forward(x, w1, b1, w2, b2))
    assert out_bf16.shape == (batch, input_dim)
    assert out_bf16.dtype == jnp.bfloat16
    assert jnp.allclose(out_bf16.astype(jnp.float32), ref, atol=2e-2, rtol=2e-2), \
        "bf16 mismatch vs reference"

    print("KERNEL_OK")
</pallas_src>

<mosaic_0001>
module attributes {stable_mosaic.version = 11 : i64} {
  func.func @autoencoder_kernel(%arg0: i32, %arg1: memref<8x128xf32, #tpu.memory_space<vmem>>, %arg2: memref<128x128xf32, #tpu.memory_space<vmem>>, %arg3: memref<1x128xf32, #tpu.memory_space<vmem>>, %arg4: memref<128x128xf32, #tpu.memory_space<vmem>>, %arg5: memref<1x128xf32, #tpu.memory_space<vmem>>, %arg6: memref<8x128xf32, #tpu.memory_space<vmem>>) attributes {dimension_semantics = [#tpu.dimension_semantics<parallel>], iteration_bounds = array<i64: 1>, scalar_prefetch = 0 : i64, scratch_operands = 0 : i64, tpu.core_type = #tpu.core_type<tc>, window_params = [{transform_indices = @transform_0, window_bounds = array<i64: 8, 128>}, {pipeline_mode = #tpu.pipeline_mode<synchronous>, transform_indices = @transform_1, window_bounds = array<i64: 128, 128>}, {pipeline_mode = #tpu.pipeline_mode<synchronous>, transform_indices = @transform_2, window_bounds = array<i64: 1, 128>}, {pipeline_mode = #tpu.pipeline_mode<synchronous>, transform_indices = @transform_3, window_bounds = array<i64: 128, 128>}, {pipeline_mode = #tpu.pipeline_mode<synchronous>, transform_indices = @transform_4, window_bounds = array<i64: 1, 128>}, {transform_indices = @transform_5, window_bounds = array<i64: 8, 128>}]} {
    %c0 = arith.constant 0 : index
    %c0_0 = arith.constant 0 : index
    %0 = vector.load %arg1[%c0, %c0_0] : memref<8x128xf32, #tpu.memory_space<vmem>>, vector<8x128xf32>
    %c0_1 = arith.constant 0 : index
    %c0_2 = arith.constant 0 : index
    %1 = vector.load %arg2[%c0_1, %c0_2] : memref<128x128xf32, #tpu.memory_space<vmem>>, vector<128x128xf32>
    %cst = arith.constant dense<0.000000e+00> : vector<8x128xf32>
    %2 = tpu.matmul %0, %1, %cst {dimension_numbers = #tpu.dot_dimension_numbers<[1], [0], [0], [1], [0, 0, 1, 1], [], []>} : vector<8x128xf32>, vector<128x128xf32>, vector<8x128xf32> -> vector<8x128xf32>
    %c0_3 = arith.constant 0 : index
    %c0_4 = arith.constant 0 : index
    %3 = vector.load %arg3[%c0_3, %c0_4] : memref<1x128xf32, #tpu.memory_space<vmem>>, vector<1x128xf32>
    %4 = vector.broadcast %3 : vector<1x128xf32> to vector<8x128xf32>
    %5 = arith.addf %2, %4 : vector<8x128xf32>
    %cst_5 = arith.constant 0.000000e+00 : f32
    %6 = vector.broadcast %cst_5 : f32 to vector<8x128xf32>
    %7 = arith.maximumf %5, %6 : vector<8x128xf32>
    %c0_6 = arith.constant 0 : index
    %c0_7 = arith.constant 0 : index
    %8 = vector.load %arg4[%c0_6, %c0_7] : memref<128x128xf32, #tpu.memory_space<vmem>>, vector<128x128xf32>
    %cst_8 = arith.constant dense<0.000000e+00> : vector<8x128xf32>
    %9 = tpu.matmul %7, %8, %cst_8 {dimension_numbers = #tpu.dot_dimension_numbers<[1], [0], [0], [1], [0, 0, 1, 1], [], []>} : vector<8x128xf32>, vector<128x128xf32>, vector<8x128xf32> -> vector<8x128xf32>
    %c0_9 = arith.constant 0 : index
    %c0_10 = arith.constant 0 : index
    %10 = vector.load %arg5[%c0_9, %c0_10] : memref<1x128xf32, #tpu.memory_space<vmem>>, vector<1x128xf32>
    %11 = vector.broadcast %10 : vector<1x128xf32> to vector<8x128xf32>
    %12 = arith.addf %9, %11 : vector<8x128xf32>
    %13 = arith.negf %12 : vector<8x128xf32>
    %14 = math.exp %13 : vector<8x128xf32>
    %cst_11 = arith.constant 1.000000e+00 : f32
    %15 = vector.broadcast %cst_11 : f32 to vector<8x128xf32>
    %16 = arith.addf %15, %14 : vector<8x128xf32>
    %17 = arith.divf %15, %16 : vector<8x128xf32>
    %c0_12 = arith.constant 0 : index
    %c0_13 = arith.constant 0 : index
    %18 = vector.load %arg6[%c0_12, %c0_13] : memref<8x128xf32, #tpu.memory_space<vmem>>, vector<8x128xf32>
    tpu.vector_store %arg6[%c0_12, %c0_13], %17 {strides = array<i32>} : memref<8x128xf32, #tpu.memory_space<vmem>>, vector<8x128xf32>,
    return
  }
  func.func @transform_0(%arg0: i32) -> (i32, i32) {
    %c0_i32 = arith.constant 0 : i32
    %c0_i32_0 = arith.constant 0 : i32
    return %arg0, %c0_i32 : i32, i32
  }
  func.func @transform_1(%arg0: i32) -> (i32, i32) {
    %c0_i32 = arith.constant 0 : i32
    %c0_i32_0 = arith.constant 0 : i32
    %c0_i32_1 = arith.constant 0 : i32
    return %c0_i32, %c0_i32_0 : i32, i32
  }
  func.func @transform_2(%arg0: i32) -> (i32, i32) {
    %c0_i32 = arith.constant 0 : i32
    %c0_i32_0 = arith.constant 0 : i32
    %c0_i32_1 = arith.constant 0 : i32
    return %c0_i32, %c0_i32_0 : i32, i32
  }
  func.func @transform_3(%arg0: i32) -> (i32, i32) {
    %c0_i32 = arith.constant 0 : i32
    %c0_i32_0 = arith.constant 0 : i32
    %c0_i32_1 = arith.constant 0 : i32
    return %c0_i32, %c0_i32_0 : i32, i32
  }
  func.func @transform_4(%arg0: i32) -> (i32, i32) {
    %c0_i32 = arith.constant 0 : i32
    %c0_i32_0 = arith.constant 0 : i32
    %c0_i32_1 = arith.constant 0 : i32
    return %c0_i32, %c0_i32_0 : i32, i32
  }
  func.func @transform_5(%arg0: i32) -> (i32, i32) {
    %c0_i32 = arith.constant 0 : i32
    %c0_i32_0 = arith.constant 0 : i32
    return %arg0, %c0_i32 : i32, i32
  }
}

</mosaic_0001>

<llo_original>
// kernel: tpu_custom_call.1
$region0: #{tpu_custom_call.1}
  #allocation0 [shape = 'u32[]', space=smem, size = 0x4, offset = 0x4, fixed_abs, tag = 'smem constant byte address 0x4 - core index']
  #allocation1 [shape = 'u32[72,128]{1,0:T(1,128)}', space=vmem, size = 0x9000, scoped, tag = 'internal scratch']
  %s0 = inlined_call_operand.hbm [shape: f32[8,128], index: 0, kind: input, shape index: {}]
  %s1 = inlined_call_operand.hbm [shape: f32[128,128], index: 1, kind: input, shape index: {}]
  %s2 = inlined_call_operand.vmem [shape: f32[1,128], index: 2, kind: input, shape index: {}]
  %s3 = inlined_call_operand.hbm [shape: f32[128,128], index: 3, kind: input, shape index: {}]
  %s4 = inlined_call_operand.vmem [shape: f32[1,128], index: 4, kind: input, shape index: {}]
  %s5 = inlined_call_operand.hbm [shape: f32[8,128], index: 5, kind: output, shape index: {}]
  %s6 = sld [smem:[#allocation0]]
  $region42: #{tpu_custom_call.1} parent=0
    _
  %s8 = ssub.s32 1, %s6
  %s9 = scalar_select 0, %s8, %s6
  $region1: #{tpu_custom_call.1} parent=0
    #allocation2 [shape = 'u8[4096]{0}', space=vmem, size = 0x1000, scoped, tag = 'input window, operand 0, single buffered']
    #allocation3 [shape = 's32[1]{0}', space=sflag, size = 0x4, scoped, tag = 'scoped memory for tpu_custom_call.1']
    #allocation4 [shape = 's32[1]{0}', space=sflag, size = 0x4, scoped, tag = 'scoped memory for tpu_custom_call.1']
    #allocation5 [shape = 'u8[65536]{0}', space=vmem, size = 0x10000, scoped, tag = 'input window, operand 1, single buffered']
    #allocation6 [shape = 's32[1]{0}', space=sflag, size = 0x4, scoped, tag = 'scoped memory for tpu_custom_call.1']
    #allocation7 [shape = 'u8[65536]{0}', space=vmem, size = 0x10000, scoped, tag = 'input window, operand 3, single buffered']
    #allocation8 [shape = 'u8[4096]{0}', space=vmem, size = 0x1000, scoped, tag = 'output window, operand 0, single buffered']
    %10 = vsyncpa [#allocation3], 0
    %11 = vsyncpa [#allocation6], 0
    %12 = vsyncpa [#allocation4], 0
    // Predicated region
    $region2: #{tpu_custom_call.1} parent=1 // pred_check
      _
    $region3: #{tpu_custom_call.1} parent=1 // pred_check_branch
      %14 = sbr.rel (0) target = $region5
    $region4: #{tpu_custom_call.1} parent=1 // pred_region
      %16 = vsyncadd [#allocation3], 0
      %s18 = sshll.u32 %s0, 4
      %s19 = int_to_ptr.hbm [resolvable:$true] %s18
      %s20 = sshll.u32 [#allocation2], 4
      %s21 = int_to_ptr.vmem [resolvable:$true] %s20
      %23 = dma.hbm_to_vmem [thread:$0]  %s19, 128, %s21, [#allocation3]
    $region5: #{tpu_custom_call.1} parent=1 // pred_fallthru
      _
    // Predicated region
    $region6: #{tpu_custom_call.1} parent=1 // pred_check
      _
    $region7: #{tpu_custom_call.1} parent=1 // pred_check_branch
      %25 = sbr.rel (0) target = $region9
    $region8: #{tpu_custom_call.1} parent=1 // pred_region
      %27 = vsyncadd [#allocation6], 0
      %s28 = sshll.u32 %s1, 4
      %s29 = int_to_ptr.hbm [resolvable:$true] %s28
      %s30 = sshll.u32 [#allocation5], 4
      %s31 = int_to_ptr.vmem [resolvable:$true] %s30
      %36 = dma.hbm_to_vmem [thread:$0]  %s29, 2048, %s31, [#allocation6], 128, 128, 8
    $region9: #{tpu_custom_call.1} parent=1 // pred_fallthru
      _
    // Predicated region
    $region10: #{tpu_custom_call.1} parent=1 // pred_check
      _
    $region11: #{tpu_custom_call.1} parent=1 // pred_check_branch
      %38 = sbr.rel (0) target = $region13
    $region12: #{tpu_custom_call.1} parent=1 // pred_region
      _
    $region13: #{tpu_custom_call.1} parent=1 // pred_fallthru
      _
    // Predicated region
    $region14: #{tpu_custom_call.1} parent=1 // pred_check
      _
    $region15: #{tpu_custom_call.1} parent=1 // pred_check_branch
      %40 = sbr.rel (0) target = $region17
    $region16: #{tpu_custom_call.1} parent=1 // pred_region
      %42 = vsyncadd [#allocation6], 0
      %s43 = sshll.u32 %s3, 4
      %s44 = int_to_ptr.hbm [resolvable:$true] %s43
      %s45 = sshll.u32 [#allocation7], 4
      %s46 = int_to_ptr.vmem [resolvable:$true] %s45
      %51 = dma.hbm_to_vmem [thread:$0]  %s44, 2048, %s46, [#allocation6], 128, 128, 8
    $region17: #{tpu_custom_call.1} parent=1 // pred_fallthru
      _
    // Predicated region
    $region18: #{tpu_custom_call.1} parent=1 // pred_check
      _
    $region19: #{tpu_custom_call.1} parent=1 // pred_check_branch
      %53 = sbr.rel (0) target = $region21
    $region20: #{tpu_custom_call.1} parent=1 // pred_region
      _
    $region21: #{tpu_custom_call.1} parent=1 // pred_fallthru
      _
    // Predicated region
    $region22: #{tpu_custom_call.1} parent=1 // pred_check
      _
    $region23: #{tpu_custom_call.1} parent=1 // pred_check_branch
      %55 = sbr.rel (0) target = $region25
    $region24: #{tpu_custom_call.1} parent=1 // pred_region
      %57 = dma.done [#allocation3], 128
    $region25: #{tpu_custom_call.1} parent=1 // pred_fallthru
      _
    // Predicated region
    $region26: #{tpu_custom_call.1} parent=1 // pred_check
      _
    $region27: #{tpu_custom_call.1} parent=1 // pred_check_branch
      %59 = sbr.rel (0) target = $region29
    $region28: #{tpu_custom_call.1} parent=1 // pred_region
      %61 = dma.done [#allocation6], 2048
    $region29: #{tpu_custom_call.1} parent=1 // pred_fallthru
      _
    // Predicated region
    $region30: #{tpu_custom_call.1} parent=1 // pred_check
      _
    $region31: #{tpu_custom_call.1} parent=1 // pred_check_branch
      %63 = sbr.rel (0) target = $region33
    $region32: #{tpu_custom_call.1} parent=1 // pred_region
      %65 = dma.done [#allocation6], 2048
    $region33: #{tpu_custom_call.1} parent=1 // pred_fallthru
      _
    %v66 = vld [vmem:[#allocation2] sm:$0xff]
    %v67 = vld [vmem:[#allocation5] sm:$0xff]
    %v68 = vld [vmem:[#allocation5 + $0x8] sm:$0xff]
    %v69 = vld [vmem:[#allocation5 + $0x10] sm:$0xff]
    %v70 = vld [vmem:[#allocation5 + $0x18] sm:$0xff]
    %v71 = vld [vmem:[#allocation5 + $0x20] sm:$0xff]
    %v72 = vld [vmem:[#allocation5 + $0x28] sm:$0xff]
    %v73 = vld [vmem:[#allocation5 + $0x30] sm:$0xff]
    %v74 = vld [vmem:[#allocation5 + $0x38] sm:$0xff]
    %v75 = vld [vmem:[#allocation5 + $0x40] sm:$0xff]
    %v76 = vld [vmem:[#allocation5 + $0x48] sm:$0xff]
    %v77 = vld [vmem:[#allocation5 + $0x50] sm:$0xff]
    %v78 = vld [vmem:[#allocation5 + $0x58] sm:$0xff]
    %v79 = vld [vmem:[#allocation5 + $0x60] sm:$0xff]
    %v80 = vld [vmem:[#allocation5 + $0x68] sm:$0xff]
    %v81 = vld [vmem:[#allocation5 + $0x70] sm:$0xff]
    %v82 = vld [vmem:[#allocation5 + $0x78] sm:$0xff]
    %v83 = vld [vmem:[%s2] sm:$0x1]
    %v85 = vperm.slane %v83, 0
    %87 = vmatpush.msra.mxu0 %v82
    %88 = vmatpush.msra.mxu0 %v81
    %89 = vmatpush.msra.mxu0 %v80
    %90 = vmatpush.msra.mxu0 %v79
    %91 = vmatpush.msra.mxu0 %v78
    %92 = vmatpush.msra.mxu0 %v77
    %93 = vmatpush.msra.mxu0 %v76
    %94 = vmatpush.msra.mxu0 %v75
    %95 = vmatpush.msra.mxu0 %v74
    %96 = vmatpush.msra.mxu0 %v73
    %97 = vmatpush.msra.mxu0 %v72
    %98 = vmatpush.msra.mxu0 %v71
    %99 = vmatpush.msra.mxu0 %v70
    %100 = vmatpush.msra.mxu0 %v69
    %101 = vmatpush.msra.mxu0 %v68
    %102 = vmatpush.msra.mxu0 %v67
    %103 = vmatmul.f32.gmra.mxu0 %v66
    %v104 = vpop.f32.mrf.mxu0
    %v105 = vadd.f32 %v85, %v104
    %106 = vdwg.mxu0
    %v107 = vmax.f32 %v105, 0.0
    %v108 = vld [vmem:[#allocation7] sm:$0xff]
    %v109 = vld [vmem:[#allocation7 + $0x8] sm:$0xff]
    %v110 = vld [vmem:[#allocation7 + $0x10] sm:$0xff]
    %v111 = vld [vmem:[#allocation7 + $0x18] sm:$0xff]
    %v112 = vld [vmem:[#allocation7 + $0x20] sm:$0xff]
    %v113 = vld [vmem:[#allocation7 + $0x28] sm:$0xff]
    %v114 = vld [vmem:[#allocation7 + $0x30] sm:$0xff]
    %v115 = vld [vmem:[#allocation7 + $0x38] sm:$0xff]
    %v116 = vld [vmem:[#allocation7 + $0x40] sm:$0xff]
    %v117 = vld [vmem:[#allocation7 + $0x48] sm:$0xff]
    %v118 = vld [vmem:[#allocation7 + $0x50] sm:$0xff]
    %v119 = vld [vmem:[#allocation7 + $0x58] sm:$0xff]
    %v120 = vld [vmem:[#allocation7 + $0x60] sm:$0xff]
    %v121 = vld [vmem:[#allocation7 + $0x68] sm:$0xff]
    %v122 = vld [vmem:[#allocation7 + $0x70] sm:$0xff]
    %v123 = vld [vmem:[#allocation7 + $0x78] sm:$0xff]
    %v124 = vld [vmem:[%s4] sm:$0x1]
    %v126 = vperm.slane %v124, 0
    %128 = vmatpush.msra.mxu0 %v123
    %129 = vmatpush.msra.mxu0 %v122
    %130 = vmatpush.msra.mxu0 %v121
    %131 = vmatpush.msra.mxu0 %v120
    %132 = vmatpush.msra.mxu0 %v119
    %133 = vmatpush.msra.mxu0 %v118
    %134 = vmatpush.msra.mxu0 %v117
    %135 = vmatpush.msra.mxu0 %v116
    %136 = vmatpush.msra.mxu0 %v115
    %137 = vmatpush.msra.mxu0 %v114
    %138 = vmatpush.msra.mxu0 %v113
    %139 = vmatpush.msra.mxu0 %v112
    %140 = vmatpush.msra.mxu0 %v111
    %141 = vmatpush.msra.mxu0 %v110
    %142 = vmatpush.msra.mxu0 %v109
    %143 = vmatpush.msra.mxu0 %v108
    %144 = vmatmul.f32.gmra.mxu0 %v107
    %v145 = vpop.f32.mrf.mxu0
    %v146 = vadd.f32 %v126, %v145
    %147 = vdwg.mxu0
    %v148 = vxor.u32 %v146, 2147483648
    %v149 = vmul.f32 %v148, 1.442695
    %v150 = vpow.pop %v149
    %v151 = vadd.f32 %v150, 1.0
    %v152 = vrcp.pop %v151
    %v153 = vmul.f32 %v151, %v152
    %v154 = vsub.f32 1.0, %v153
    %v155 = vmul.f32 %v152, %v154
    %v156 = vadd.f32 %v152, %v155
    %vm157 = vweird.f32 %v151
    %vm158 = vweird.f32 %v152
    %vm159 = vmor %vm157, %vm158
    %v160 = vsel %vm159, %v152, %v156
    %v161 = vand.u32 2147483647, %v151
    %vm162 = vcmp.eq.f32.partialorder %v161, 8.507059e+37
    %v163 = vand.u32 %v151, 2147483648
    %v164 = vor.u32 1.1754944e-38, %v163
    %v165 = vsel %vm162, %v164, %v160
    %v166 = vmul.f32 1.0, %v165
    %167 = vst [vmem:[#allocation8] sm:$0xff] %v166
    // Predicated region
    $region34: #{tpu_custom_call.1} parent=1 // pred_check
      _
    $region35: #{tpu_custom_call.1} parent=1 // pred_check_branch
      %169 = sbr.rel (0) target = $region37
    $region36: #{tpu_custom_call.1} parent=1 // pred_region
      %171 = vsyncadd [#allocation4], 0
      %s173 = sshll.u32 [#allocation8], 4
      %s174 = int_to_ptr.vmem [resolvable:$true] %s173
      %s175 = sshll.u32 %s5, 4
      %s176 = int_to_ptr.hbm [resolvable:$true] %s175
      %178 = dma.vmem_to_hbm [thread:$0]  %s174, 128, %s176, [#allocation4]
    $region37: #{tpu_custom_call.1} parent=1 // pred_fallthru
      _
    // Predicated region
    $region38: #{tpu_custom_call.1} parent=1 // pred_check
      _
    $region39: #{tpu_custom_call.1} parent=1 // pred_check_branch
      %180 = sbr.rel (0) target = $region41
    $region40: #{tpu_custom_call.1} parent=1 // pred_region
      %182 = dma.done [#allocation4], 128
    $region41: #{tpu_custom_call.1} parent=1 // pred_fallthru
      _
    %183 = vsyncpa [#allocation3], 1
    %184 = vsyncpa [#allocation6], 1
    %185 = vsyncpa [#allocation4], 1

</llo_original>
